<compile_context>
chip_gen: v7x
topology: tpu7x:2x2x1
jax: 0.10.0
libtpu: 0.0.40
codegen_flags: <defaults>
</compile_context>

<pallas_src>
import functools

import jax
import jax.numpy as jnp
from jax import lax
from jax.experimental import pallas as pl
from jax.experimental.pallas import tpu as pltpu

EPS = 1e-5  # nn.BatchNorm2d default


def _round_up(x, m):
    return ((x + m - 1) // m) * m


def _sublane_pack(itemsize):
    # Packed rows per sublane group: 8 for f32, 16 for bf16/f16, 32 for int8/fp8.
    return max(8, 32 // max(1, itemsize))


def _default_vmem_limit_bytes():
    # v5e/v6e: 128 MiB physical VMEM -> allow a 64 MiB scoped limit / bigger tiles.
    # v7x (64 MiB physical) or unknown: stay at the conservative 32 MiB.
    try:
        info = pltpu.get_tpu_info()
        cap = getattr(info, "vmem_capacity_bytes", None)
        if cap is not None and cap >= (100 << 20):
            return 64 << 20
    except Exception:
        pass
    return 32 << 20


def _choose_c_block(n, c, hw, itemsize, pack, max_block_bytes):
    """Largest channel block whose *physical* x tile (HW padded to 128 lanes, channels
    packed to `pack` sublanes) fits the per-tile budget; rounded to `pack`; capped so
    the channel grid keeps >= ~4 steps when C is large enough."""
    hw_pad = _round_up(hw, 128)
    per_chan = n * hw_pad * itemsize
    max_c = max_block_bytes // per_chan
    c_blk = max(pack, (max_c // pack) * pack)
    if c >= 4 * pack:                              # keep >= ~4 grid steps (v7x megacore)
        c_blk = min(c_blk, _round_up(pl.cdiv(c, 4), pack))
    if c_blk >= c:
        return c
    return c_blk


# ----------------------------- single-pass kernel ----------------------------- #

def _cbn_fused_kernel(x_ref, g1_ref, beta_ref, o_ref, *, c_blk, n_blocks):
    # x_ref:  (N, c_blk, HW)      -- one channel block, full (N, HW) so stats are local
    # g1_ref: (N, C_pad, 1)       -- (1 + gamma), resident (constant block index)
    # beta_ref: (N, C_pad, 1)
    x = x_ref[...]
    n, cb, hw = x_ref.shape
    inv_count = 1.0 / float(n * hw)

    # BatchNorm2d(affine=False), training mode: biased per-channel stats over (N, H*W).
    # Lane (HW) reduction -> XLU; tiny N reduction -> cross-vreg adds.  Only the
    # (·, c_blk, 1) accumulators are f32; the centred square streams into the reduce.
    s = jnp.sum(x, axis=2, keepdims=True, dtype=jnp.float32)        # (N, cb, 1)
    mean = jnp.sum(s, axis=0, keepdims=True) * inv_count            # (1, cb, 1)
    d = x.astype(jnp.float32) - mean                                # transient, reduce-only
    sq = jnp.sum(d * d, axis=2, keepdims=True)                      # (N, cb, 1)
    var = jnp.sum(sq, axis=0, keepdims=True) * inv_count            # centred -> >= 0
    inv_std = lax.rsqrt(var + EPS)

    if n_blocks == 1:
        g1 = g1_ref[...]
        beta = beta_ref[...]
    else:
        start = pl.multiple_of(pl.program_id(0) * c_blk, 8)
        g1 = g1_ref[:, pl.ds(start, c_blk), :]
        beta = beta_ref[:, pl.ds(start, c_blk), :]

    # Single FMA epilogue on the original-dtype tile.
    scale = g1 * inv_std                                            # (N, cb, 1)
    shift = beta - mean * scale                                     # (N, cb, 1)
    o_ref[...] = (x * scale + shift).astype(o_ref.dtype)


def _cbn_single_pass(x3, g1, beta, *, c_blk, vmem_limit):
    n, c, hw = x3.shape
    n_blocks = pl.cdiv(c, c_blk)
    c_pad = n_blocks * c_blk
    g1 = g1.reshape(n, c, 1)
    beta = beta.reshape(n, c, 1)
    if c_pad > c:  # keep the in-kernel pl.ds slice in-bounds for the ragged last block
        pad = ((0, 0), (0, c_pad - c), (0, 0))
        g1 = jnp.pad(g1, pad)
        beta = jnp.pad(beta, pad)

    kernel = functools.partial(_cbn_fused_kernel, c_blk=c_blk, n_blocks=n_blocks)
    return pl.pallas_call(
        kernel,
        out_shape=jax.ShapeDtypeStruct((n, c, hw), x3.dtype),
        grid=(n_blocks,),
        in_specs=[
            pl.BlockSpec((n, c_blk, hw), lambda ci: (0, ci, 0)),
            # gamma/beta are tiny: constant block index -> DMA'd once, stays resident.
            pl.BlockSpec((n, c_pad, 1), lambda ci: (0, 0, 0)),
            pl.BlockSpec((n, c_pad, 1), lambda ci: (0, 0, 0)),
        ],
        out_specs=pl.BlockSpec((n, c_blk, hw), lambda ci: (0, ci, 0)),
        compiler_params=pltpu.CompilerParams(
            dimension_semantics=("parallel",),
            vmem_limit_bytes=vmem_limit,
        ),
    )(x3, g1, beta)


# ------------------------- two-pass fallback (large N*HW) ------------------------- #

def _stats_kernel(x_ref, sum_ref, sq_ref, *, hw, hw_blk):
    hi = pl.program_id(1)

    @pl.when(hi == 0)
    def _():
        sum_ref[...] = jnp.zeros_like(sum_ref)
        sq_ref[...] = jnp.zeros_like(sq_ref)

    x = x_ref[...].astype(jnp.float32)                    # (N, c_blk, hw_blk)
    if hw % hw_blk != 0:                                  # mask ragged HW tail
        lane = lax.broadcasted_iota(jnp.int32, x.shape, 2)
        x = jnp.where(hi * hw_blk + lane < hw, x, 0.0)
    ps = jnp.sum(x, axis=2, keepdims=True)                # (N, c_blk, 1)
    pq = jnp.sum(x * x, axis=2, keepdims=True)
    sum_ref[...] += jnp.sum(ps, axis=0, keepdims=True).reshape(sum_ref.shape)
    sq_ref[...] += jnp.sum(pq, axis=0, keepdims=True).reshape(sq_ref.shape)


def _apply_kernel(x_ref, scale_ref, shift_ref, o_ref):
    o_ref[...] = (x_ref[...] * scale_ref[...] + shift_ref[...]).astype(o_ref.dtype)


def _cbn_two_pass(x3, g1, beta, *, pack, max_block_bytes, vmem_limit):
    # Pass 1: per-channel sum / sum-of-squares accumulated over an "arbitrary" HW axis.
    # Pass 2: FMA with precomputed per-(n, channel) scale/shift.  One extra read of x.
    n, c, hw = x3.shape
    itemsize = jnp.dtype(x3.dtype).itemsize
    c_blk = c if c <= pack else pack
    max_hw = max(1, max_block_bytes // (n * pack * itemsize))
    if hw > 128 and max_hw >= 128:
        hw_blk = max(128, min((max_hw // 128) * 128, (hw // 128) * 128))
    else:
        hw_blk = hw  # TODO(synk): also tile N if an (N, pack, 128) tile is still too big.
    n_cblk = pl.cdiv(c, c_blk)
    n_hblk = pl.cdiv(hw, hw_blk)

    sums, sqs = pl.pallas_call(
        functools.partial(_stats_kernel, hw=hw, hw_blk=hw_blk),
        out_shape=(jax.ShapeDtypeStruct((c, 1), jnp.float32),
                   jax.ShapeDtypeStruct((c, 1), jnp.float32)),
        grid=(n_cblk, n_hblk),
        in_specs=[pl.BlockSpec((n, c_blk, hw_blk), lambda ci, hi: (0, ci, hi))],
        out_specs=(pl.BlockSpec((c_blk, 1), lambda ci, hi: (ci, 0)),
                   pl.BlockSpec((c_blk, 1), lambda ci, hi: (ci, 0))),
        compiler_params=pltpu.CompilerParams(
            dimension_semantics=("parallel", "arbitrary"),
            vmem_limit_bytes=vmem_limit,
        ),
    )(x3)

    count = float(n * hw)
    mean = sums[:, 0] / count                                    # (C,)  f32 accumulation
    var = jnp.maximum(sqs[:, 0] / count - mean * mean, 0.0)
    inv_std = lax.rsqrt(var + EPS)
    scale = g1 * inv_std[None, :]                                # (N, C)
    shift = beta - mean[None, :] * scale                         # (N, C)

    return pl.pallas_call(
        _apply_kernel,
        out_shape=jax.ShapeDtypeStruct((n, c, hw), x3.dtype),
        grid=(n_cblk, n_hblk),
        in_specs=[
            pl.BlockSpec((n, c_blk, hw_blk), lambda ci, hi: (0, ci, hi)),
            pl.BlockSpec((n, c_blk, 1), lambda ci, hi: (0, ci, 0)),
            pl.BlockSpec((n, c_blk, 1), lambda ci, hi: (0, ci, 0)),
        ],
        out_specs=pl.BlockSpec((n, c_blk, hw_blk), lambda ci, hi: (0, ci, hi)),
        compiler_params=pltpu.CompilerParams(
            dimension_semantics=("parallel", "parallel"),
            vmem_limit_bytes=vmem_limit,
        ),
    )(x3, scale.reshape(n, c, 1), shift.reshape(n, c, 1))


# ----------------------------------- wrapper ----------------------------------- #

def conditional_batch_norm2d(x_nchw, cond, weight, bias, *,
                             max_block_bytes=None, vmem_limit_bytes=None):
    """
    Forward of ConditionalBatchNorm2d:
        out = BN2d(x; affine=False, training-mode batch stats) * (1 + gamma) + beta
        [gamma | beta] = cond @ weight.T + bias          (nn.Linear(cond_dim, 2*C))
    x_nchw: (N, C, H, W); cond: (N, D); weight: (2C, D); bias: (2C,)
    """
    n, c, h, w = x_nchw.shape
    hw = h * w
    x3 = x_nchw.reshape(n, c, hw)   # free reshape: keeps NCHW memory order, HW on lanes

    # Tiny (N, 2C) Linear hoisted off the per-tile path; computed exactly once.
    gb = (cond.astype(jnp.float32) @ weight.astype(jnp.float32).T
          + bias.astype(jnp.float32))
    g1 = 1.0 + gb[:, :c]            # (N, C)  scale term (1 + gamma)
    beta = gb[:, c:]                # (N, C)

    itemsize = jnp.dtype(x_nchw.dtype).itemsize
    pack = _sublane_pack(itemsize)
    if vmem_limit_bytes is None:
        vmem_limit_bytes = _default_vmem_limit_bytes()
    if max_block_bytes is None:
        # Budget for 2x(in) + 2x(out) double buffers + transient f32 intermediates.
        max_block_bytes = vmem_limit_bytes // 8

    hw_pad = _round_up(hw, 128)
    fits_single_pass = n * pack * hw_pad * itemsize <= max_block_bytes

    if fits_single_pass:
        c_blk = _choose_c_block(n, c, hw, itemsize, pack, max_block_bytes)
        out = _cbn_single_pass(x3, g1, beta, c_blk=c_blk, vmem_limit=vmem_limit_bytes)
    else:
        out = _cbn_two_pass(x3, g1, beta, pack=pack,
                            max_block_bytes=max_block_bytes,
                            vmem_limit=vmem_limit_bytes)
    return out.reshape(n, c, h, w)


def _reference(x_nchw, cond, weight, bias):
    # Pure-JAX reference of the PyTorch forward (training-mode BN, biased variance).
    mean = jnp.mean(x_nchw, axis=(0, 2, 3), keepdims=True)
    var = jnp.mean((x_nchw - mean) ** 2, axis=(0, 2, 3), keepdims=True)
    xn = (x_nchw - mean) / jnp.sqrt(var + EPS)
    gb = cond @ weight.T + bias
    c = x_nchw.shape[1]
    gamma = gb[:, :c][:, :, None, None]
    beta = gb[:, c:][:, :, None, None]
    return xn * (1 + gamma) + beta


if __name__ == "__main__":
    key = jax.random.PRNGKey(0)
    k_x, k_c, k_w, k_b = jax.random.split(key, 4)

    N, C, H, W = 2, 4, 16, 16
    COND_DIM = 32

    x = jax.random.normal(k_x, (N, C, H, W), dtype=jnp.float32)
    cond = jax.random.normal(k_c, (N, COND_DIM), dtype=jnp.float32)
    lin_w = jax.random.normal(k_w, (2 * C, COND_DIM), dtype=jnp.float32) * 0.1
    lin_b = jax.random.normal(k_b, (2 * C,), dtype=jnp.float32) * 0.1

    # 1) default single-pass path (whole C in one block)
    ref = _reference(x, cond, lin_w, lin_b)
    out = jax.block_until_ready(conditional_batch_norm2d(x, cond, lin_w, lin_b))
    assert out.shape == (N, C, H, W)
    assert jnp.allclose(out, ref, atol=1e-4, rtol=1e-4), "single-pass mismatch"

    # 2) multi-block channel grid with a ragged last block (C=12, c_blk forced to 8)
    C2 = 12
    x2 = jax.random.normal(k_x, (N, C2, H, W), dtype=jnp.float32)
    w2 = jax.random.normal(k_w, (2 * C2, COND_DIM), dtype=jnp.float32) * 0.1
    b2 = jax.random.normal(k_b, (2 * C2,), dtype=jnp.float32) * 0.1
    ref2 = _reference(x2, cond, w2, b2)
    out2 = jax.block_until_ready(
        conditional_batch_norm2d(x2, cond, w2, b2, max_block_bytes=16 << 10))
    assert jnp.allclose(out2, ref2, atol=1e-4, rtol=1e-4), "ragged-C mismatch"

    # 3) two-pass fallback path (budget too small even for an (N, 8, HW) tile)
    out3 = jax.block_until_ready(
        conditional_batch_norm2d(x2, cond, w2, b2, max_block_bytes=8 << 10))
    assert jnp.allclose(out3, ref2, atol=1e-4, rtol=1e-4), "two-pass mismatch"

    print("KERNEL_OK")
</pallas_src>

<mosaic_0001>
module attributes {stable_mosaic.version = 11 : i64} {
  func.func @_cbn_fused_kernel(%arg0: i32, %arg1: memref<2x4x256xf32, #tpu.memory_space<vmem>>, %arg2: memref<2x4x1xf32, #tpu.memory_space<vmem>>, %arg3: memref<2x4x1xf32, #tpu.memory_space<vmem>>, %arg4: memref<2x4x256xf32, #tpu.memory_space<vmem>>) attributes {dimension_semantics = [#tpu.dimension_semantics<parallel>], iteration_bounds = array<i64: 1>, scalar_prefetch = 0 : i64, scratch_operands = 0 : i64, tpu.core_type = #tpu.core_type<tc>, window_params = [{transform_indices = @transform_0, window_bounds = array<i64: 2, 4, 256>}, {pipeline_mode = #tpu.pipeline_mode<synchronous>, transform_indices = @transform_1, window_bounds = array<i64: 2, 4, 1>}, {pipeline_mode = #tpu.pipeline_mode<synchronous>, transform_indices = @transform_2, window_bounds = array<i64: 2, 4, 1>}, {transform_indices = @transform_3, window_bounds = array<i64: 2, 4, 256>}]} {
    %c0 = arith.constant 0 : index
    %c0_0 = arith.constant 0 : index
    %c0_1 = arith.constant 0 : index
    %0 = vector.load %arg1[%c0, %c0_0, %c0_1] : memref<2x4x256xf32, #tpu.memory_space<vmem>>, vector<2x4x256xf32>
    %cst = arith.constant dense<0.000000e+00> : vector<2x4xf32>
    %1 = vector.multi_reduction <add>, %0, %cst [2] : vector<2x4x256xf32> to vector<2x4xf32>
    %2 = vector.shape_cast %1 : vector<2x4xf32> to vector<2x4x1xf32>
    %cst_2 = arith.constant dense<0.000000e+00> : vector<4x1xf32>
    %3 = vector.multi_reduction <add>, %2, %cst_2 [0] : vector<2x4x1xf32> to vector<4x1xf32>
    %4 = vector.shape_cast %3 : vector<4x1xf32> to vector<1x4x1xf32>
    %cst_3 = arith.constant 0.001953125 : f32
    %5 = vector.broadcast %cst_3 : f32 to vector<1x4x1xf32>
    %6 = arith.mulf %4, %5 : vector<1x4x1xf32>
    %7 = vector.broadcast %6 : vector<1x4x1xf32> to vector<2x4x256xf32>
    %8 = arith.subf %0, %7 : vector<2x4x256xf32>
    %9 = arith.mulf %8, %8 : vector<2x4x256xf32>
    %cst_4 = arith.constant dense<0.000000e+00> : vector<2x4xf32>
    %10 = vector.multi_reduction <add>, %9, %cst_4 [2] : vector<2x4x256xf32> to vector<2x4xf32>
    %11 = vector.shape_cast %10 : vector<2x4xf32> to vector<2x4x1xf32>
    %cst_5 = arith.constant dense<0.000000e+00> : vector<4x1xf32>
    %12 = vector.multi_reduction <add>, %11, %cst_5 [0] : vector<2x4x1xf32> to vector<4x1xf32>
    %13 = vector.shape_cast %12 : vector<4x1xf32> to vector<1x4x1xf32>
    %cst_6 = arith.constant 0.001953125 : f32
    %14 = vector.broadcast %cst_6 : f32 to vector<1x4x1xf32>
    %15 = arith.mulf %13, %14 : vector<1x4x1xf32>
    %cst_7 = arith.constant 9.99999974E-6 : f32
    %16 = vector.broadcast %cst_7 : f32 to vector<1x4x1xf32>
    %17 = arith.addf %15, %16 : vector<1x4x1xf32>
    %18 = math.rsqrt %17 : vector<1x4x1xf32>
    %c0_8 = arith.constant 0 : index
    %c0_9 = arith.constant 0 : index
    %c0_10 = arith.constant 0 : index
    %19 = vector.load %arg2[%c0_8, %c0_9, %c0_10] : memref<2x4x1xf32, #tpu.memory_space<vmem>>, vector<2x4x1xf32>
    %c0_11 = arith.constant 0 : index
    %c0_12 = arith.constant 0 : index
    %c0_13 = arith.constant 0 : index
    %20 = vector.load %arg3[%c0_11, %c0_12, %c0_13] : memref<2x4x1xf32, #tpu.memory_space<vmem>>, vector<2x4x1xf32>
    %21 = vector.broadcast %18 : vector<1x4x1xf32> to vector<2x4x1xf32>
    %22 = arith.mulf %19, %21 : vector<2x4x1xf32>
    %23 = vector.broadcast %6 : vector<1x4x1xf32> to vector<2x4x1xf32>
    %24 = arith.mulf %23, %22 : vector<2x4x1xf32>
    %25 = arith.subf %20, %24 : vector<2x4x1xf32>
    %26 = vector.broadcast %22 : vector<2x4x1xf32> to vector<2x4x256xf32>
    %27 = arith.mulf %0, %26 : vector<2x4x256xf32>
    %28 = vector.broadcast %25 : vector<2x4x1xf32> to vector<2x4x256xf32>
    %29 = arith.addf %27, %28 : vector<2x4x256xf32>
    %c0_14 = arith.constant 0 : index
    %c0_15 = arith.constant 0 : index
    %c0_16 = arith.constant 0 : index
    %30 = vector.load %arg4[%c0_14, %c0_15, %c0_16] : memref<2x4x256xf32, #tpu.memory_space<vmem>>, vector<2x4x256xf32>
    tpu.vector_store %arg4[%c0_14, %c0_15, %c0_16], %29 {strides = array<i32>} : memref<2x4x256xf32, #tpu.memory_space<vmem>>, vector<2x4x256xf32>,
    return
  }
  func.func @transform_0(%arg0: i32) -> (i32, i32, i32) {
    %c0_i32 = arith.constant 0 : i32
    %c0_i32_0 = arith.constant 0 : i32
    %c0_i32_1 = arith.constant 0 : i32
    return %c0_i32, %arg0, %c0_i32_0 : i32, i32, i32
  }
  func.func @transform_1(%arg0: i32) -> (i32, i32, i32) {
    %c0_i32 = arith.constant 0 : i32
    %c0_i32_0 = arith.constant 0 : i32
    %c0_i32_1 = arith.constant 0 : i32
    %c0_i32_2 = arith.constant 0 : i32
    return %c0_i32, %c0_i32_0, %c0_i32_1 : i32, i32, i32
  }
  func.func @transform_2(%arg0: i32) -> (i32, i32, i32) {
    %c0_i32 = arith.constant 0 : i32
    %c0_i32_0 = arith.constant 0 : i32
    %c0_i32_1 = arith.constant 0 : i32
    %c0_i32_2 = arith.constant 0 : i32
    return %c0_i32, %c0_i32_0, %c0_i32_1 : i32, i32, i32
  }
  func.func @transform_3(%arg0: i32) -> (i32, i32, i32) {
    %c0_i32 = arith.constant 0 : i32
    %c0_i32_0 = arith.constant 0 : i32
    %c0_i32_1 = arith.constant 0 : i32
    return %c0_i32, %arg0, %c0_i32_0 : i32, i32, i32
  }
}

</mosaic_0001>

<llo_original>
// kernel: tpu_custom_call.1
$region0: #{tpu_custom_call.1}
  #allocation0 [shape = 'u32[]', space=smem, size = 0x4, offset = 0x4, fixed_abs, tag = 'smem constant byte address 0x4 - core index']
  #allocation1 [shape = 'u32[144,128]{1,0:T(1,128)}', space=vmem, size = 0x12000, scoped, tag = 'internal scratch']
  %s0 = inlined_call_operand.vmem [shape: f32[2,4,256], index: 0, kind: input, shape index: {}]
  %s1 = inlined_call_operand.vmem [shape: f32[2,4,1], index: 1, kind: input, shape index: {}]
  %s2 = inlined_call_operand.vmem [shape: f32[2,4,1], index: 2, kind: input, shape index: {}]
  %s3 = inlined_call_operand.hbm [shape: f32[2,4,256], index: 3, kind: output, shape index: {}]
  %s4 = sld [smem:[#allocation0]]
  $region22: #{tpu_custom_call.1} parent=0
    _
  %s6 = ssub.s32 1, %s4
  %s7 = scalar_select 0, %s6, %s4
  $region1: #{tpu_custom_call.1} parent=0
    #allocation2 [shape = 'u8[8192]{0}', space=vmem, size = 0x2000, scoped, tag = 'output window, operand 0, single buffered']
    #allocation3 [shape = 's32[1]{0}', space=sflag, size = 0x4, scoped, tag = 'scoped memory for tpu_custom_call.1']
    %8 = vsyncpa [#allocation3], 0
    // Predicated region
    $region2: #{tpu_custom_call.1} parent=1 // pred_check
      _
    $region3: #{tpu_custom_call.1} parent=1 // pred_check_branch
      %10 = sbr.rel (0) target = $region5
    $region4: #{tpu_custom_call.1} parent=1 // pred_region
      _
    $region5: #{tpu_custom_call.1} parent=1 // pred_fallthru
      _
    // Predicated region
    $region6: #{tpu_custom_call.1} parent=1 // pred_check
      _
    $region7: #{tpu_custom_call.1} parent=1 // pred_check_branch
      %12 = sbr.rel (0) target = $region9
    $region8: #{tpu_custom_call.1} parent=1 // pred_region
      _
    $region9: #{tpu_custom_call.1} parent=1 // pred_fallthru
      _
    // Predicated region
    $region10: #{tpu_custom_call.1} parent=1 // pred_check
      _
    $region11: #{tpu_custom_call.1} parent=1 // pred_check_branch
      %14 = sbr.rel (0) target = $region13
    $region12: #{tpu_custom_call.1} parent=1 // pred_region
      _
    $region13: #{tpu_custom_call.1} parent=1 // pred_fallthru
      _
    %v15 = vld [vmem:[%s0] sm:$0xff]
    %v16 = vld [vmem:[%s0 + $0x8] sm:$0xff]
    %v19 = vcombine.high %v15, %v15
    %v20 = vcombine.high %v16, %v16
    %vm23 = vcmask 1043456
    %v24 = vsel %vm23, %v15, 0.0
    %v25 = vsel %vm23, %v19, 0.0
    %v26 = vadd.f32 %v24, %v25
    %27 = vadd.xlane.f32.xlu0 %v26
    %v28 = vpop.xlane.xlu0 %27
    %v29 = vsel %vm23, %v16, 0.0
    %v30 = vsel %vm23, %v20, 0.0
    %v31 = vadd.f32 %v29, %v30
    %32 = vadd.xlane.f32.xlu0 %v31
    %v33 = vpop.xlane.xlu0 %32
    %v34 = vsel %vm23, %v28, 0.0
    %v35 = vsel %vm23, %v33, 0.0
    %v36 = vadd.f32 %v34, %v35
    %v37 = vmul.f32 %v36, 0.001953125
    %v40 = vunpack.c.l.s4 839922192
    %v41 = vunpack.c.0.s8 %v40
    %v42 = vlaneseq
    %v43 = vshrl.u32 %v42, 7
    %v44 = vsub.s32 %v41, %v43
    %v45 = vrot.slane %v37, %v44
    %v47 = vsub.f32 %v15, %v45
    %v48 = vsub.f32 %v16, %v45
    %v49 = vmul.f32 %v47, %v47
    %v50 = vmul.f32 %v48, %v48
    %v53 = vcombine.high %v49, %v49
    %v54 = vcombine.high %v50, %v50
    %v57 = vsel %vm23, %v49, 0.0
    %v58 = vsel %vm23, %v53, 0.0
    %v59 = vadd.f32 %v57, %v58
    %60 = vadd.xlane.f32.xlu0 %v59
    %v61 = vpop.xlane.xlu0 %60
    %v62 = vsel %vm23, %v50, 0.0
    %v63 = vsel %vm23, %v54, 0.0
    %v64 = vadd.f32 %v62, %v63
    %65 = vadd.xlane.f32.xlu0 %v64
    %v66 = vpop.xlane.xlu0 %65
    %v67 = vsel %vm23, %v61, 0.0
    %v68 = vsel %vm23, %v66, 0.0
    %v69 = vadd.f32 %v67, %v68
    %v70 = vmul.f32 %v69, 0.001953125
    %v71 = vadd.f32 %v70, 1e-05
    %v72 = vrsqrt.pop %v71
    %v73 = vld [vmem:[%s1] sm:$0xf]
    %v74 = vld [vmem:[%s1 + $0x4] sm:$0xf]
    %v75 = vld [vmem:[%s2] sm:$0xf]
    %v76 = vld [vmem:[%s2 + $0x4] sm:$0xf]
    %v77 = vmul.f32 %v73, %v72
    %v78 = vmul.f32 %v74, %v72
    %v79 = vmul.f32 %v37, %v77
    %v80 = vmul.f32 %v37, %v78
    %v81 = vsub.f32 %v75, %v79
    %v82 = vsub.f32 %v76, %v80
    %84 = vset.pattern.permute.xlu0 0
    %85 = vperm.xlu0 %84, %v77
    %v86 = vpop.permute.xlu0 %85
    %88 = vset.pattern.permute.xlu0 0
    %89 = vperm.xlu0 %88, %v78
    %v90 = vpop.permute.xlu0 %89
    %v92 = vunpack.c.l.s4 839922192
    %v93 = vunpack.c.0.s8 %v92
    %v94 = vlaneseq
    %v95 = vshrl.u32 %v94, 7
    %v96 = vsub.s32 %v93, %v95
    %v97 = vrot.slane %v86, %v96
    %v99 = vunpack.c.l.s4 839922192
    %v100 = vunpack.c.0.s8 %v99
    %v101 = vlaneseq
    %v102 = vshrl.u32 %v101, 7
    %v103 = vsub.s32 %v100, %v102
    %v104 = vrot.slane %v90, %v103
    %v107 = vmul.f32 %v15, %v97
    %v108 = vmul.f32 %v16, %v104
    %110 = vset.pattern.permute.xlu0 0
    %111 = vperm.xlu0 %110, %v81
    %v112 = vpop.permute.xlu0 %111
    %114 = vset.pattern.permute.xlu0 0
    %115 = vperm.xlu0 %114, %v82
    %v116 = vpop.permute.xlu0 %115
    %v118 = vunpack.c.l.s4 839922192
    %v119 = vunpack.c.0.s8 %v118
    %v120 = vlaneseq
    %v121 = vshrl.u32 %v120, 7
    %v122 = vsub.s32 %v119, %v121
    %v123 = vrot.slane %v112, %v122
    %v125 = vunpack.c.l.s4 839922192
    %v126 = vunpack.c.0.s8 %v125
    %v127 = vlaneseq
    %v128 = vshrl.u32 %v127, 7
    %v129 = vsub.s32 %v126, %v128
    %v130 = vrot.slane %v116, %v129
    %v133 = vadd.f32 %v107, %v123
    %v134 = vadd.f32 %v108, %v130
    %135 = vst [vmem:[#allocation2] sm:$0xff] %v133
    %136 = vst [vmem:[#allocation2 + $0x8] sm:$0xff] %v134
    // Predicated region
    $region14: #{tpu_custom_call.1} parent=1 // pred_check
      _
    $region15: #{tpu_custom_call.1} parent=1 // pred_check_branch
      %138 = sbr.rel (0) target = $region17
    $region16: #{tpu_custom_call.1} parent=1 // pred_region
      %s140 = ssub.s32 256, 256
      %141 = vsyncadd [#allocation3], %s140
      %s142 = sshll.u32 [#allocation2], 4
      %s143 = int_to_ptr.vmem [resolvable:$true] %s142
      %148 = dma.vmem_to_hbm [thread:$0]  %s143, 256, %s3, [#allocation3], 128, 128, 8
    $region17: #{tpu_custom_call.1} parent=1 // pred_fallthru
      _
    // Predicated region
    $region18: #{tpu_custom_call.1} parent=1 // pred_check
      _
    $region19: #{tpu_custom_call.1} parent=1 // pred_check_branch
      %150 = sbr.rel (0) target = $region21
    $region20: #{tpu_custom_call.1} parent=1 // pred_region
      %151 = dma.done [#allocation3], 256
    $region21: #{tpu_custom_call.1} parent=1 // pred_fallthru
      _
    %152 = vsyncpa [#allocation3], 1

</llo_original>
